<compile_context>
chip_gen: v6e
topology: v6e:2x2x1
jax: 0.10.0
libtpu: 0.0.40
codegen_flags: <defaults>
</compile_context>

<pallas_src>
import functools

import jax
import jax.numpy as jnp
from jax.experimental import pallas as pl
from jax.experimental.pallas import tpu as pltpu

_LANES = 128
_SUBLANES = 8
_TM_MAX = 2048  # rows per tile: 1 MiB f32 per input tile, 4 MiB double-buffered


def _focal_terms(x, y, alpha, gamma):
    """Elementwise focal-BCE term; matches the PyTorch forward exactly.

    PyTorch: probs = sigmoid(x); coeff = -|y - probs|**gamma;
             loss  = coeff * (y*a*log(p) + (1-y)*(1-a)*log(1-p))
    with log(p) = -softplus(-x) and log(1-p) = log(p) - x
    (softplus(x) - softplus(-x) = x), so both `where` branches collapse into a
    single exp/log1p chain.  Used both in the kernel and the plain-JAX tail.
    """
    z = jnp.exp(-jnp.abs(x))                        # z in (0, 1]: never overflows
    sp_neg = jnp.maximum(-x, 0.0) + jnp.log1p(z)    # softplus(-x) = -log(sigmoid(x))
    # sigmoid on the EUP (tanh) — no divide / reciprocal / select in the VALU slot.
    probs = 0.5 * jnp.tanh(0.5 * x) + 0.5
    d = y - probs
    # Folded weights: loss = -|d|^g * (w*log_p - b*x),
    #   w = (1-a) + y*(2a-1),  b = (1-a)*(1-y)
    w = (1.0 - alpha) + y * (2.0 * alpha - 1.0)
    bx = ((1.0 - alpha) - (1.0 - alpha) * y) * x
    if gamma == 2:
        return (d * d) * (w * sp_neg + bx)          # both minus signs folded away
    return -(jnp.abs(d) ** gamma) * (-(w * sp_neg) - bx)


def _focal_loss_kernel(x_ref, y_ref, out_ref, *, alpha, gamma, tm):
    x = x_ref[...].astype(jnp.float32)
    y = y_ref[...].astype(jnp.float32)
    loss = _focal_terms(x, y, alpha, gamma)
    # Reduce only across 8-row sublane groups: pure vreg adds (no XLU), and the
    # resulting (8, 128) partial is stored as a full unmasked tile.
    partial = jnp.sum(loss.reshape(tm // _SUBLANES, _SUBLANES, _LANES), axis=0)
    out_ref[...] = partial[None]


def focal_loss(logits, label, alpha=0.25, gamma=2, reduction="mean"):
    assert logits.shape == label.shape
    n_elem = int(logits.size)
    alpha = float(alpha)
    g = float(gamma)
    gamma = int(g) if g.is_integer() else g   # keep `**` an integer power

    # Copy-free flatten; bf16/int inputs are welcome (cast to f32 in-kernel).
    x_flat = jnp.ravel(logits)
    y_flat = jnp.ravel(label)

    rows = n_elem // _LANES                       # full 128-lane rows
    rows8 = (rows // _SUBLANES) * _SUBLANES       # rows the kernel covers (maskless)

    n_main = 0
    total = jnp.zeros((), jnp.float32)

    if rows8 >= _SUBLANES:
        if rows8 >= 2 * _TM_MAX:
            tm = _TM_MAX
        elif rows8 >= 2 * _SUBLANES:
            # Split into >=2 tiles so the 'parallel' axis uses both TCs on v7x.
            tm = min(_TM_MAX, ((rows8 // 2) // _SUBLANES) * _SUBLANES)
        else:
            tm = rows8
        num_tiles = rows8 // tm
        main_rows = num_tiles * tm
        n_main = main_rows * _LANES

        x2d = x_flat[:n_main].reshape(main_rows, _LANES)   # zero-copy views
        y2d = y_flat[:n_main].reshape(main_rows, _LANES)

        kernel = functools.partial(
            _focal_loss_kernel, alpha=alpha, gamma=gamma, tm=tm)
        in_spec = pl.BlockSpec((tm, _LANES), lambda i: (i, 0))

        partials = pl.pallas_call(
            kernel,
            out_shape=jax.ShapeDtypeStruct(
                (num_tiles, _SUBLANES, _LANES), jnp.float32),
            grid_spec=pltpu.PrefetchScalarGridSpec(
                num_scalar_prefetch=0,
                grid=(num_tiles,),
                in_specs=[in_spec, in_spec],
                out_specs=pl.BlockSpec((1, _SUBLANES, _LANES),
                                       lambda i: (i, 0, 0)),
            ),
            compiler_params=pltpu.CompilerParams(
                dimension_semantics=("parallel",),
                vmem_limit_bytes=32 * 1024 * 1024),
            cost_estimate=pl.CostEstimate(
                flops=20 * n_main,
                transcendentals=3 * n_main,
                bytes_accessed=(x2d.dtype.itemsize + y2d.dtype.itemsize) * n_main
                + num_tiles * _SUBLANES * _LANES * 4),
        )(x2d, y2d)
        total = total + jnp.sum(partials)

    if n_main < n_elem:
        # Remainder (< tm rows + a <128-element tail): plain JAX, identical math.
        xt = x_flat[n_main:].astype(jnp.float32)
        yt = y_flat[n_main:].astype(jnp.float32)
        total = total + jnp.sum(_focal_terms(xt, yt, alpha, gamma))

    if reduction == "mean":
        return total / jnp.float32(n_elem)
    if reduction == "sum":
        return total
    raise NotImplementedError("reduction='none' not supported by this kernel")
    # TODO(synk): add an elementwise-output kernel for reduction='none'.


def _focal_loss_ref(logits, label, alpha=0.25, gamma=2, reduction="mean"):
    """Pure-JAX reference mirroring the PyTorch forward exactly."""
    x = logits.astype(jnp.float32)
    y = label.astype(jnp.float32)
    probs = jax.nn.sigmoid(x)
    coeff = -(jnp.abs(y - probs) ** gamma)
    sp_neg = jnp.where(-x <= 50.0, -jnp.log1p(jnp.exp(-x)), x)
    sp_pos = jnp.where(x <= 50.0, jnp.log1p(jnp.exp(x)), x)
    log_probs = jnp.where(x >= 0.0, sp_neg, x - sp_pos)
    log_1_probs = jnp.where(x >= 0.0, -x + sp_neg, -sp_pos)
    loss = (y * alpha * log_probs + (1.0 - y) * (1.0 - alpha) * log_1_probs)
    loss = loss * coeff
    if reduction == "mean":
        return jnp.mean(loss)
    return jnp.sum(loss)


if __name__ == "__main__":
    key = jax.random.PRNGKey(0)
    k1, k2, k3, k4 = jax.random.split(key, 4)

    # Small NCHW shapes consistent with the module's docstring usage.
    logits = jax.random.normal(k1, (2, 4, 16, 16), dtype=jnp.float32)
    label = jax.random.randint(k2, (2, 4, 16, 16), 0, 2).astype(jnp.float32)

    out = focal_loss(logits, label, alpha=0.25, gamma=2, reduction="mean")
    out = jax.block_until_ready(out)
    ref = _focal_loss_ref(logits, label)
    assert jnp.allclose(out, ref, rtol=1e-5, atol=1e-6), (out, ref)

    # Odd-sized case exercising the plain-JAX remainder path.
    logits2 = jax.random.normal(k3, (3, 5, 7, 11), dtype=jnp.float32)
    label2 = jax.random.randint(k4, (3, 5, 7, 11), 0, 2).astype(jnp.float32)
    out2 = jax.block_until_ready(focal_loss(logits2, label2))
    ref2 = _focal_loss_ref(logits2, label2)
    assert jnp.allclose(out2, ref2, rtol=1e-5, atol=1e-6), (out2, ref2)

    print("KERNEL_OK")
</pallas_src>

<mosaic_0001>
module attributes {stable_mosaic.version = 11 : i64} {
  func.func @_focal_loss_kernel(%arg0: i32, %arg1: memref<8x128xf32, #tpu.memory_space<vmem>>, %arg2: memref<8x128xf32, #tpu.memory_space<vmem>>, %arg3: memref<1x8x128xf32, #tpu.memory_space<vmem>>) attributes {dimension_semantics = [#tpu.dimension_semantics<parallel>], iteration_bounds = array<i64: 2>, scalar_prefetch = 0 : i64, scratch_operands = 0 : i64, tpu.core_type = #tpu.core_type<tc>, window_params = [{transform_indices = @transform_0, window_bounds = array<i64: 8, 128>}, {transform_indices = @transform_1, window_bounds = array<i64: 8, 128>}, {transform_indices = @transform_2, window_bounds = array<i64: 1, 8, 128>}]} {
    %c0 = arith.constant 0 : index
    %c0_0 = arith.constant 0 : index
    %0 = vector.load %arg1[%c0, %c0_0] : memref<8x128xf32, #tpu.memory_space<vmem>>, vector<8x128xf32>
    %c0_1 = arith.constant 0 : index
    %c0_2 = arith.constant 0 : index
    %1 = vector.load %arg2[%c0_1, %c0_2] : memref<8x128xf32, #tpu.memory_space<vmem>>, vector<8x128xf32>
    %2 = math.absf %0 : vector<8x128xf32>
    %cst = arith.constant 0.000000e+00 : f32
    %3 = vector.broadcast %cst : f32 to vector<8x128xf32>
    %4 = arith.subf %3, %2 : vector<8x128xf32>
    %5 = math.exp %4 : vector<8x128xf32>
    %cst_3 = arith.constant 0.000000e+00 : f32
    %6 = vector.broadcast %cst_3 : f32 to vector<8x128xf32>
    %7 = arith.subf %6, %0 : vector<8x128xf32>
    %cst_4 = arith.constant 0.000000e+00 : f32
    %8 = vector.broadcast %cst_4 : f32 to vector<8x128xf32>
    %9 = arith.maximumf %7, %8 : vector<8x128xf32>
    %10 = math.log1p %5 : vector<8x128xf32>
    %11 = arith.addf %9, %10 : vector<8x128xf32>
    %cst_5 = arith.constant 5.000000e-01 : f32
    %12 = vector.broadcast %cst_5 : f32 to vector<8x128xf32>
    %13 = arith.mulf %12, %0 : vector<8x128xf32>
    %14 = math.tanh %13 : vector<8x128xf32>
    %cst_6 = arith.constant 5.000000e-01 : f32
    %15 = vector.broadcast %cst_6 : f32 to vector<8x128xf32>
    %16 = arith.mulf %15, %14 : vector<8x128xf32>
    %cst_7 = arith.constant 5.000000e-01 : f32
    %17 = vector.broadcast %cst_7 : f32 to vector<8x128xf32>
    %18 = arith.addf %16, %17 : vector<8x128xf32>
    %19 = arith.subf %1, %18 : vector<8x128xf32>
    %cst_8 = arith.constant -5.000000e-01 : f32
    %20 = vector.broadcast %cst_8 : f32 to vector<8x128xf32>
    %21 = arith.mulf %1, %20 : vector<8x128xf32>
    %cst_9 = arith.constant 7.500000e-01 : f32
    %22 = vector.broadcast %cst_9 : f32 to vector<8x128xf32>
    %23 = arith.addf %22, %21 : vector<8x128xf32>
    %cst_10 = arith.constant 7.500000e-01 : f32
    %24 = vector.broadcast %cst_10 : f32 to vector<8x128xf32>
    %25 = arith.mulf %24, %1 : vector<8x128xf32>
    %cst_11 = arith.constant 7.500000e-01 : f32
    %26 = vector.broadcast %cst_11 : f32 to vector<8x128xf32>
    %27 = arith.subf %26, %25 : vector<8x128xf32>
    %28 = arith.mulf %27, %0 : vector<8x128xf32>
    %29 = arith.mulf %19, %19 : vector<8x128xf32>
    %30 = arith.mulf %23, %11 : vector<8x128xf32>
    %31 = arith.addf %30, %28 : vector<8x128xf32>
    %32 = arith.mulf %29, %31 : vector<8x128xf32>
    %33 = vector.shape_cast %32 : vector<8x128xf32> to vector<1x8x128xf32>
    %cst_12 = arith.constant dense<0.000000e+00> : vector<8x128xf32>
    %34 = vector.multi_reduction <add>, %33, %cst_12 [0] : vector<1x8x128xf32> to vector<8x128xf32>
    %35 = vector.shape_cast %34 : vector<8x128xf32> to vector<1x8x128xf32>
    %c0_13 = arith.constant 0 : index
    %c0_14 = arith.constant 0 : index
    %c0_15 = arith.constant 0 : index
    %36 = vector.load %arg3[%c0_13, %c0_14, %c0_15] : memref<1x8x128xf32, #tpu.memory_space<vmem>>, vector<1x8x128xf32>
    tpu.vector_store %arg3[%c0_13, %c0_14, %c0_15], %35 {strides = array<i32>} : memref<1x8x128xf32, #tpu.memory_space<vmem>>, vector<1x8x128xf32>,
    return
  }
  func.func @transform_0(%arg0: i32) -> (i32, i32) {
    %c0_i32 = arith.constant 0 : i32
    %c0_i32_0 = arith.constant 0 : i32
    return %arg0, %c0_i32 : i32, i32
  }
  func.func @transform_1(%arg0: i32) -> (i32, i32) {
    %c0_i32 = arith.constant 0 : i32
    %c0_i32_0 = arith.constant 0 : i32
    return %arg0, %c0_i32 : i32, i32
  }
  func.func @transform_2(%arg0: i32) -> (i32, i32, i32) {
    %c0_i32 = arith.constant 0 : i32
    %c0_i32_0 = arith.constant 0 : i32
    %c0_i32_1 = arith.constant 0 : i32
    return %arg0, %c0_i32, %c0_i32_0 : i32, i32, i32
  }
}

</mosaic_0001>

<llo_original>
// kernel: tpu_custom_call.1
$region0: #{tpu_custom_call.1}
  #allocation0 [shape = 'u32[]', space=smem, size = 0x4, offset = 0x4, fixed_abs, tag = 'smem constant byte address 0x4 - core index']
  #allocation1 [shape = 'u32[144,128]{1,0:T(1,128)}', space=vmem, size = 0x12000, scoped, tag = 'internal scratch']
  %s0 = inlined_call_operand.hbm [shape: f32[16,128], index: 0, kind: input, shape index: {}]
  %s1 = inlined_call_operand.hbm [shape: f32[16,128], index: 1, kind: input, shape index: {}]
  %s2 = inlined_call_operand.hbm [shape: f32[2,8,128], index: 2, kind: output, shape index: {}]
  %s3 = sld [smem:[#allocation0]]
  $region49: #{tpu_custom_call.1} parent=0
    _
  %s5 = ssub.s32 1, %s3
  %s6 = scalar_select 0, %s5, %s3
  $region1: #{tpu_custom_call.1} parent=0
    #allocation2 [shape = 'u8[8192]{0}', space=vmem, size = 0x2000, scoped, tag = 'input window, operand 0']
    #allocation3 [shape = 's32[2]{0}', space=sflag, size = 0x8, scoped, tag = 'scoped memory for tpu_custom_call.1']
    #allocation4 [shape = 's32[2]{0}', space=sflag, size = 0x8, scoped, tag = 'scoped memory for tpu_custom_call.1']
    #allocation5 [shape = 'u8[8192]{0}', space=vmem, size = 0x2000, scoped, tag = 'input window, operand 1']
    #allocation6 [shape = 's32[2]{0}', space=sflag, size = 0x8, scoped, tag = 'scoped memory for tpu_custom_call.1']
    #allocation7 [shape = 'u8[8192]{0}', space=vmem, size = 0x2000, scoped, tag = 'output window, operand 0']
    %7 = vsyncpa [#allocation3], 0
    %s8 = scalar_lea.sflag [#allocation3], 1
    %9 = vsyncpa %s8, 0
    %10 = vsyncpa [#allocation6], 0
    %s11 = scalar_lea.sflag [#allocation6], 1
    %12 = vsyncpa %s11, 0
    %13 = vsyncpa [#allocation4], 0
    %s14 = scalar_lea.sflag [#allocation4], 1
    %15 = vsyncpa %s14, 0
    loop: start=0, step=1, limit=4
    $region2: #{tpu_custom_call.1} parent=1 // loop_pre_header
      _
    $region3: #{tpu_custom_call.1} parent=1 // loop_header
      %s17 = sphi 0, %s21
      %p18 = scmp.ge.s32.totalorder %s17, 4
      %s27 = sphi 0, %s29
      %s30 = sphi 0, %s27
      %s31 = sphi 0, %s30
      %s47 = sphi 0, %s31
      %s53 = sphi 0, %s55
      %s56 = sphi 0, %s53
      %s57 = sphi 0, %s56
      %s73 = sphi 0, %s57
      %s79 = sphi 0, %s81
      %s82 = sphi 0, %s79
      %s83 = sphi 0, %s82
      %s99 = sphi 0, %s83
    $region4: #{tpu_custom_call.1} parent=1 // loop_header_branch
      %20 = sbr.rel (%p18) target = $region8
    $region5: #{tpu_custom_call.1} parent=1 // loop_body
      %s22 = ssub.s32 %s17, 1
      %s23 = ssub.s32 %s17, 2
      %s24 = sadd.s32 %s17, 1
      %s25 = ssub.s32 %s17, %s24
      %p26 = scmp.eq.s32.totalorder %s25, 0
      %s28 = sadd.s32 %s27, 1
      %s29 = scalar_select %p26, %s27, %s28
      %p32 = pneg %p26
      %p33 = scmp.eq.s32.totalorder %s17, 1
      %p34 = por %p32, %p33
      %p35 = scmp.ne.s32.totalorder %s27, %s30
      %p36 = scmp.eq.s32.totalorder %s17, 0
      %p37 = por %p35, %p36
      %p38 = scmp.ne.s32.totalorder %s27, %s30
      %p39 = scmp.eq.s32.totalorder %s22, 1
      %p40 = por %p38, %p39
      %p41 = scmp.ne.s32.totalorder %s30, %s31
      %p42 = scmp.eq.s32.totalorder %s22, 0
      %p43 = por %p41, %p42
      %p44 = scmp.ne.s32.totalorder %s30, %s31
      %p45 = scmp.eq.s32.totalorder %s23, 1
      %p46 = por %p44, %p45
      %p48 = scmp.ne.s32.totalorder %s31, %s47
      %p49 = scmp.eq.s32.totalorder %s23, 0
      %p50 = por %p48, %p49
      %s51 = ssub.s32 %s17, %s24
      %p52 = scmp.eq.s32.totalorder %s51, 0
      %s54 = sadd.s32 %s53, 1
      %s55 = scalar_select %p52, %s53, %s54
      %p58 = pneg %p52
      %p59 = scmp.eq.s32.totalorder %s17, 1
      %p60 = por %p58, %p59
      %p61 = scmp.ne.s32.totalorder %s53, %s56
      %p62 = scmp.eq.s32.totalorder %s17, 0
      %p63 = por %p61, %p62
      %p64 = scmp.ne.s32.totalorder %s53, %s56
      %p65 = scmp.eq.s32.totalorder %s22, 1
      %p66 = por %p64, %p65
      %p67 = scmp.ne.s32.totalorder %s56, %s57
      %p68 = scmp.eq.s32.totalorder %s22, 0
      %p69 = por %p67, %p68
      %p70 = scmp.ne.s32.totalorder %s56, %s57
      %p71 = scmp.eq.s32.totalorder %s23, 1
      %p72 = por %p70, %p71
      %p74 = scmp.ne.s32.totalorder %s57, %s73
      %p75 = scmp.eq.s32.totalorder %s23, 0
      %p76 = por %p74, %p75
      %s77 = ssub.s32 %s17, %s24
      %p78 = scmp.eq.s32.totalorder %s77, 0
      %s80 = sadd.s32 %s79, 1
      %s81 = scalar_select %p78, %s79, %s80
      %p84 = pneg %p78
      %p85 = scmp.eq.s32.totalorder %s17, 1
      %p86 = por %p84, %p85
      %p87 = scmp.ne.s32.totalorder %s79, %s82
      %p88 = scmp.eq.s32.totalorder %s17, 0
      %p89 = por %p87, %p88
      %p90 = scmp.ne.s32.totalorder %s79, %s82
      %p91 = scmp.eq.s32.totalorder %s22, 1
      %p92 = por %p90, %p91
      %p93 = scmp.ne.s32.totalorder %s82, %s83
      %p94 = scmp.eq.s32.totalorder %s22, 0
      %p95 = por %p93, %p94
      %p96 = scmp.ne.s32.totalorder %s82, %s83
      %p97 = scmp.eq.s32.totalorder %s23, 1
      %p98 = por %p96, %p97
      %p100 = scmp.ne.s32.totalorder %s83, %s99
      %p101 = scmp.eq.s32.totalorder %s23, 0
      %p102 = por %p100, %p101
      %p103 = scmp.le.s32.totalorder 1, %s17
      %p104 = scmp.lt.s32.totalorder %s17, 3
      %p105 = pnand %p103, %p104
      %p106 = pneg %p105
      // Predicated region
      $region9: #{tpu_custom_call.1} parent=5 // pred_check
        _
      $region10: #{tpu_custom_call.1} parent=5 // pred_check_branch
        %108 = sbr.rel (%p105) target = $region12
      $region11: #{tpu_custom_call.1} parent=5 // pred_region
        %s109 = ssub.s32 %s17, 1
      $region12: #{tpu_custom_call.1} parent=5 // pred_fallthru
        _
      %p110 = scmp.lt.s32.totalorder %s17, 2
      // Predicated region
      $region13: #{tpu_custom_call.1} parent=5 // pred_check
        %p111 = pneg %p110
      $region14: #{tpu_custom_call.1} parent=5 // pred_check_branch
        %113 = sbr.rel (%p111) target = $region16
      $region15: #{tpu_custom_call.1} parent=5 // pred_region
        // Predicated region
        $region17: #{tpu_custom_call.1} parent=15 // pred_check
          %p114 = pneg %p37
        $region18: #{tpu_custom_call.1} parent=15 // pred_check_branch
          %116 = sbr.rel (%p114) target = $region20
        $region19: #{tpu_custom_call.1} parent=15 // pred_region
          %s117 = sand.u32 %s27, 1
          %s118 = scalar_lea.sflag [#allocation3], %s117
          %s119 = sand.u32 %s27, 1
          %s120 = smul.addr %s119, 8
          %s121 = scalar_lea.vmem [#allocation2], %s120
          %s123 = ssub.s32 128, 128
          %124 = vsyncadd %s118, %s123
          %s125 = smul.addr %s17, 128
          %s126 = scalar_lea.hbm %s0, %s125
          %s128 = sshll.u32 %s121, 4
          %s129 = int_to_ptr.vmem [resolvable:$true] %s128
          %131 = dma.hbm_to_vmem [thread:$0]  %s126, 128, %s129, %s118
        $region20: #{tpu_custom_call.1} parent=15 // pred_fallthru
          _
        // Predicated region
        $region21: #{tpu_custom_call.1} parent=15 // pred_check
          %p132 = pneg %p63
        $region22: #{tpu_custom_call.1} parent=15 // pred_check_branch
          %134 = sbr.rel (%p132) target = $region24
        $region23: #{tpu_custom_call.1} parent=15 // pred_region
          %s135 = sand.u32 %s53, 1
          %s136 = scalar_lea.sflag [#allocation6], %s135
          %s137 = sand.u32 %s53, 1
          %s138 = smul.addr %s137, 8
          %s139 = scalar_lea.vmem [#allocation5], %s138
          %s141 = ssub.s32 128, 128
          %142 = vsyncadd %s136, %s141
          %s143 = smul.addr %s17, 128
          %s144 = scalar_lea.hbm %s1, %s143
          %s146 = sshll.u32 %s139, 4
          %s147 = int_to_ptr.vmem [resolvable:$true] %s146
          %149 = dma.hbm_to_vmem [thread:$0]  %s144, 128, %s147, %s136
        $region24: #{tpu_custom_call.1} parent=15 // pred_fallthru
          _
      $region16: #{tpu_custom_call.1} parent=5 // pred_fallthru
        _
      %p150 = scmp.le.s32.totalorder 1, %s17
      %p151 = scmp.lt.s32.totalorder %s17, 3
      %p152 = pnand %p150, %p151
      %p153 = pneg %p152
      // Predicated region
      $region25: #{tpu_custom_call.1} parent=5 // pred_check
        _
      $region26: #{tpu_custom_call.1} parent=5 // pred_check_branch
        %155 = sbr.rel (%p152) target = $region28
      $region27: #{tpu_custom_call.1} parent=5 // pred_region
        %s156 = ssub.s32 %s17, 1
        %s157 = sand.u32 %s30, 1
        %s158 = scalar_lea.sflag [#allocation3], %s157
        %s159 = sand.u32 %s30, 1
        %s160 = smul.addr %s159, 8
        %s161 = scalar_lea.vmem [#allocation2], %s160
        // Predicated region
        $region29: #{tpu_custom_call.1} parent=27 // pred_check
          %p162 = pneg %p43
        $region30: #{tpu_custom_call.1} parent=27 // pred_check_branch
          %164 = sbr.rel (%p162) target = $region32
        $region31: #{tpu_custom_call.1} parent=27 // pred_region
          %165 = dma.done %s158, 128
        $region32: #{tpu_custom_call.1} parent=27 // pred_fallthru
          _
        %s166 = sand.u32 %s56, 1
        %s167 = scalar_lea.sflag [#allocation6], %s166
        %s168 = sand.u32 %s56, 1
        %s169 = smul.addr %s168, 8
        %s170 = scalar_lea.vmem [#allocation5], %s169
        // Predicated region
        $region33: #{tpu_custom_call.1} parent=27 // pred_check
          %p171 = pneg %p69
        $region34: #{tpu_custom_call.1} parent=27 // pred_check_branch
          %173 = sbr.rel (%p171) target = $region36
        $region35: #{tpu_custom_call.1} parent=27 // pred_region
          %174 = dma.done %s167, 128
        $region36: #{tpu_custom_call.1} parent=27 // pred_fallthru
          _
        %s175 = sand.u32 %s30, 1
        %s176 = scalar_lea.sflag [#allocation3], %s175
        %s177 = sand.u32 %s30, 1
        %s178 = smul.addr %s177, 8
        %s179 = scalar_lea.vmem [#allocation2], %s178
        %p180 = pneg %p43
        %p181 = pneg %p40
        %s182 = sand.u32 %s56, 1
        %s183 = scalar_lea.sflag [#allocation6], %s182
        %s184 = sand.u32 %s56, 1
        %s185 = smul.addr %s184, 8
        %s186 = scalar_lea.vmem [#allocation5], %s185
        %p187 = pneg %p69
        %p188 = pneg %p66
        %p189 = pneg %p95
        %p190 = pneg %p92
        %s191 = sand.u32 %s82, 1
        %s192 = scalar_lea.sflag [#allocation4], %s191
        %s193 = sand.u32 %s82, 1
        %s194 = smul.addr %s193, 8
        %s195 = scalar_lea.vmem [#allocation7], %s194
        %v196 = vld [vmem:[%s161] sm:$0xff]
        %v197 = vld [vmem:[%s170] sm:$0xff]
        %v198 = vand.u32 2147483647, %v196
        %v199 = vsub.f32 0.0, %v198
        %v200 = vmul.f32 %v199, 1.442695
        %v201 = vpow.pop %v200
        %v202 = vsub.f32 0.0, %v196
        %v203 = vmax.f32 %v202, 0.0
        %v204 = vadd.f32 %v201, 1.0
        %v205 = vlog2.pop %v204
        %v206 = vmul.f32 %v205, 0.6931472
        %v207 = vmul.f32 -0.5, %v201
        %v208 = vadd.f32 %v207, 1.0
        %v209 = vmul.f32 %v208, %v201
        %v210 = vand.u32 2147483647, %v201
        %vm211 = vcmp.lt.f32.partialorder %v210, 0.0004427343
        %v212 = vsel %vm211, %v209, %v206
        %v213 = vadd.f32 %v203, %v212
        %v214 = vmul.f32 %v196, 0.5
        %v215 = vtanh.pop %v214
        %v216 = vmul.f32 %v215, 0.5
        %v217 = vadd.f32 %v216, 0.5
        %v218 = vsub.f32 %v197, %v217
        %v219 = vmul.f32 %v197, -0.5
        %v220 = vadd.f32 %v219, 0.75
        %v221 = vmul.f32 %v197, 0.75
        %v222 = vsub.f32 0.75, %v221
        %v223 = vmul.f32 %v222, %v196
        %v224 = vmul.f32 %v218, %v218
        %v225 = vmul.f32 %v220, %v213
        %v226 = vadd.f32 %v225, %v223
        %v227 = vmul.f32 %v224, %v226
        %v228 = vadd.f32 %v227, 0.0
        %229 = vst [vmem:[%s195] sm:$0xff] %v228
        %s230 = sand.u32 %s82, 1
        %s231 = scalar_lea.sflag [#allocation4], %s230
        %s232 = sand.u32 %s82, 1
        %s233 = smul.addr %s232, 8
        %s234 = scalar_lea.vmem [#allocation7], %s233
        // Predicated region
        $region37: #{tpu_custom_call.1} parent=27 // pred_check
          %p235 = pneg %p92
        $region38: #{tpu_custom_call.1} parent=27 // pred_check_branch
          %237 = sbr.rel (%p235) target = $region40
        $region39: #{tpu_custom_call.1} parent=27 // pred_region
          %s239 = ssub.s32 128, 128
          %240 = vsyncadd %s231, %s239
          %s241 = smul.addr %s22, 128
          %s242 = scalar_lea.hbm %s2, %s241
          %s244 = sshll.u32 %s234, 4
          %s245 = int_to_ptr.vmem [resolvable:$true] %s244
          %247 = dma.vmem_to_hbm [thread:$0]  %s245, 128, %s242, %s231
        $region40: #{tpu_custom_call.1} parent=27 // pred_fallthru
          _
      $region28: #{tpu_custom_call.1} parent=5 // pred_fallthru
        _
      %p248 = scmp.le.s32.totalorder 2, %s17
      // Predicated region
      $region41: #{tpu_custom_call.1} parent=5 // pred_check
        %p249 = pneg %p248
      $region42: #{tpu_custom_call.1} parent=5 // pred_check_branch
        %251 = sbr.rel (%p249) target = $region44
      $region43: #{tpu_custom_call.1} parent=5 // pred_region
        %s252 = ssub.s32 %s17, 2
        // Predicated region
        $region45: #{tpu_custom_call.1} parent=43 // pred_check
          %p253 = pneg %p98
        $region46: #{tpu_custom_call.1} parent=43 // pred_check_branch
          %255 = sbr.rel (%p253) target = $region48
        $region47: #{tpu_custom_call.1} parent=43 // pred_region
          %s256 = sand.u32 %s83, 1
          %s257 = scalar_lea.sflag [#allocation4], %s256
          %s258 = sand.u32 %s83, 1
          %s259 = smul.addr %s258, 8
          %s260 = scalar_lea.vmem [#allocation7], %s259
          %261 = dma.done %s257, 128
        $region48: #{tpu_custom_call.1} parent=43 // pred_fallthru
          _
      $region44: #{tpu_custom_call.1} parent=5 // pred_fallthru
        _
    $region6: #{tpu_custom_call.1} parent=1 // loop_footer
      %s21 = sadd.s32 1, %s17
    $region7: #{tpu_custom_call.1} parent=1 // loop_footer_branch
      %16 = sbr.rel target = $region3
    $region8: #{tpu_custom_call.1} parent=1 // loop_exit
      _
    %262 = vsyncpa [#allocation3], 1
    %s263 = scalar_lea.sflag [#allocation3], 1
    %264 = vsyncpa %s263, 1
    %265 = vsyncpa [#allocation6], 1
    %s266 = scalar_lea.sflag [#allocation6], 1
    %267 = vsyncpa %s266, 1
    %268 = vsyncpa [#allocation4], 1
    %s269 = scalar_lea.sflag [#allocation4], 1
    %270 = vsyncpa %s269, 1

</llo_original>
